<compile_context>
chip_gen: v6e
topology: v6e:2x2x1
jax: 0.10.0
libtpu: 0.0.40
codegen_flags: <defaults>
</compile_context>

<pallas_src>
import functools

import jax
import jax.numpy as jnp
from jax.experimental import pallas as pl
from jax.experimental.pallas import tpu as pltpu


# ------------------------------ Pallas kernel ------------------------------ #
def _resblock_kernel(x_ref, w1_ref, b1_ref, w2_ref, b2_ref, o_ref, *,
                     width, fuse1, fuse2):
    """Fused SimpleResBlock on Bt images, (C, Bt*H*W) in-kernel layout.

    x_ref  : (Bt, Cin_p,  H*W)     bf16  input images (channels padded to mult. of 16)
    w1_ref : (Cout_p, 9*Cin_p)     bf16  conv1 weight (BN folded, tap-major / ci-minor)
    b1_ref : (Cout_p, 1)           f32   conv1 bias   (BN folded)
    w2_ref : (Cout_p, 9*Cout_p)    bf16  conv2 weight (BN folded)
    b2_ref : (Cout_p, 1)           f32   conv2 bias   (BN folded)
    o_ref  : (Bt, Cout_p, H*W)     f32   output
    """
    bt, _, hw = x_ref.shape
    w = width
    L = bt * hw  # total lane extent after concatenating the Bt images along lanes

    # ---- border masks: built once per kernel invocation, shared by both convs ----
    idx = jax.lax.broadcasted_iota(jnp.int32, (1, L), 1)
    pos = idx % hw if bt > 1 else idx          # flat position within its own image
    cpos = pos % w                             # column within the image row
    m_top = pos >= w                           # source row valid for dy = 0
    m_bot = pos < hw - w                       # source row valid for dy = 2
    m_lft = cpos > 0                           # source col valid for dx = 0
    m_rgt = cpos < w - 1                       # source col valid for dx = 2

    def _and(a, b):
        if a is None:
            return b
        if b is None:
            return a
        return jnp.logical_and(a, b)

    dym = (m_top, None, m_bot)
    dxm = (m_lft, None, m_rgt)
    masks = [_and(dym[dy], dxm[dx]) for dy in range(3) for dx in range(3)]

    def taps(a):
        """a: (C, L) bf16 -> generator of 9 shifted+masked (C, L) bf16 3x3 taps."""
        for k in range(9):
            dy, dx = divmod(k, 3)
            s = (dy - 1) * w + (dx - 1)               # flat source offset
            t = a if s == 0 else jnp.roll(a, -s, axis=1)   # t[:, j] = a[:, (j+s) % L]
            m = masks[k]
            if m is not None:                         # one fused select per tap
                t = jnp.where(m, t, jnp.zeros_like(t))
            yield t

    def conv3x3(a, w_ref, fuse):
        cin = a.shape[0]
        if fuse:
            # single fused matmul: (Cout, 9C) @ (9C, L) -> (Cout, L), f32 accumulate
            xcol = jnp.concatenate(list(taps(a)), axis=0)
            return jax.lax.dot_general(
                w_ref[...], xcol,
                dimension_numbers=(((1,), (0,)), ((), ())),
                preferred_element_type=jnp.float32)
        # large-C path: never materialize the (9C, L) buffer; accumulate per-tap matmuls
        acc = jnp.zeros((w_ref.shape[0], L), jnp.float32)
        for k, t in enumerate(taps(a)):
            acc = acc + jax.lax.dot_general(
                w_ref[:, k * cin:(k + 1) * cin], t,
                dimension_numbers=(((1,), (0,)), ((), ())),
                preferred_element_type=jnp.float32)
        return acc

    # ---- bf16 input, Bt images concatenated along lanes (one wide matmul) ----
    if bt == 1:
        x = x_ref[0]                                               # (Cin_p, L)
    else:
        x = jnp.concatenate([x_ref[b] for b in range(bt)], axis=1)

    # conv1 + folded BN + ReLU (epilogue in f32)
    y1 = jnp.maximum(conv3x3(x, w1_ref, fuse1) + b1_ref[...], 0.0)     # (Cout_p, L)

    # conv2 + folded BN (cast y1 to bf16 ONCE, before im2col)
    y2 = conv3x3(y1.astype(jnp.bfloat16), w2_ref, fuse2) + b2_ref[...]

    # residual + ReLU, lane-dense per-image stores
    out = jnp.maximum(y1 + y2, 0.0)
    if bt == 1:
        o_ref[0] = out
    else:
        for b in range(bt):
            o_ref[b] = out[:, b * hw:(b + 1) * hw]


# ------------------------------ JAX glue ----------------------------------- #
def _round_up(n, m):
    return (n + m - 1) // m * m


def _vmem_limit_bytes():
    """Generation-aware VMEM limit: ~48 MiB on 128-MiB parts, ~24 MiB on 64-MiB parts."""
    cap = 128 * 1024 * 1024
    try:
        cap = int(pltpu.get_tpu_info().vmem_capacity_bytes)
    except Exception:
        pass
    return int(min(48 * 1024 * 1024, max(16 * 1024 * 1024, cap * 3 // 8)))


def _fold_bn_oihw(w_oihw, gamma, beta, mean, var, eps=1e-5):
    """Fold BatchNorm (running stats) into the preceding bias-free conv (OIHW)."""
    scale = gamma / jnp.sqrt(var + eps)                       # (Cout,)
    w_eff = w_oihw * scale[:, None, None, None]               # (Cout, Cin, 3, 3)
    b_eff = beta - mean * scale                               # (Cout,)
    return w_eff, b_eff


def _fold_bn_matmul(w_oihw, gamma, beta, mean, var, *, cin_pad, cout_pad, eps=1e-5):
    """BN-folded conv weight as a (Cout_p, 9*Cin_p) bf16 matmul operand + f32 bias."""
    cout, cin = w_oihw.shape[0], w_oihw.shape[1]
    w_eff, b_eff = _fold_bn_oihw(w_oihw, gamma, beta, mean, var, eps)
    w_eff = jnp.pad(w_eff, ((0, cout_pad - cout), (0, cin_pad - cin), (0, 0), (0, 0)))
    b_eff = jnp.pad(b_eff, (0, cout_pad - cout))
    # (Cout_p, Cin_p, 3, 3) -> (Cout_p, 3, 3, Cin_p) -> (Cout_p, 9*Cin_p)
    # column ordering: k = dy*3+dx major, ci minor  (matches in-kernel tap order)
    w_mat = jnp.transpose(w_eff, (0, 2, 3, 1)).reshape(cout_pad, 9 * cin_pad)
    return w_mat.astype(jnp.bfloat16), b_eff.reshape(cout_pad, 1).astype(jnp.float32)


def simple_res_block(x, params):
    """x: (N, Cin, H, W) f32 -> (N, Cout, H, W) f32."""
    N, Cin, H, Wd = x.shape
    Cout = params["w1"].shape[0]
    HW = H * Wd

    # pad channel counts to a multiple of 16 (bf16 (16,128) sublane tile); extras are zero
    Cin_p = _round_up(max(Cin, 16), 16)
    Cout_p = _round_up(max(Cout, 16), 16)

    w1, b1 = _fold_bn_matmul(params["w1"], params["g1"], params["be1"],
                             params["m1"], params["v1"],
                             cin_pad=Cin_p, cout_pad=Cout_p)
    w2, b2 = _fold_bn_matmul(params["w2"], params["g2"], params["be2"],
                             params["m2"], params["v2"],
                             cin_pad=Cout_p, cout_pad=Cout_p)

    # images per grid step: target a >=512-wide matmul lane dim to amortize per-step overhead
    Bt = max(1, min(N, (512 + HW - 1) // HW))
    N_pad = _round_up(N, Bt)

    # free NCHW -> (N, C, H*W) reshape; bf16 cast (halves input DMA); small zero pads
    x_flat = x.reshape(N, Cin, HW).astype(jnp.bfloat16)
    if (N_pad != N) or (Cin_p != Cin):
        x_flat = jnp.pad(x_flat, ((0, N_pad - N), (0, Cin_p - Cin), (0, 0)))

    # fused single-matmul im2col for small C; per-tap accumulation for MXU-saturating C
    fuse1 = Cin_p < 128
    fuse2 = Cout_p < 128

    kernel = functools.partial(_resblock_kernel, width=Wd, fuse1=fuse1, fuse2=fuse2)

    out_flat = pl.pallas_call(
        kernel,
        out_shape=jax.ShapeDtypeStruct((N_pad, Cout_p, HW), jnp.float32),
        grid_spec=pltpu.PrefetchScalarGridSpec(
            num_scalar_prefetch=0,
            grid=(N_pad // Bt,),
            in_specs=[
                pl.BlockSpec((Bt, Cin_p, HW), lambda n: (n, 0, 0)),
                pl.BlockSpec((Cout_p, 9 * Cin_p), lambda n: (0, 0)),
                pl.BlockSpec((Cout_p, 1), lambda n: (0, 0)),
                pl.BlockSpec((Cout_p, 9 * Cout_p), lambda n: (0, 0)),
                pl.BlockSpec((Cout_p, 1), lambda n: (0, 0)),
            ],
            out_specs=pl.BlockSpec((Bt, Cout_p, HW), lambda n: (n, 0, 0)),
        ),
        compiler_params=pltpu.CompilerParams(
            dimension_semantics=("parallel",),
            vmem_limit_bytes=_vmem_limit_bytes(),
        ),
    )(x_flat, w1, b1, w2, b2)

    # drop batch/channel padding, free reshape back to NCHW
    return out_flat[:N, :Cout, :].reshape(N, Cout, H, Wd)


# --------------------- pure-JAX reference (for checking) -------------------- #
def simple_res_block_ref(x, params, matmul_dtype=jnp.bfloat16):
    """Reference with the same (folded-BN, eval) semantics; matmul_dtype controls
    the conv input dtype (bf16 mirrors the kernel's MXU numerics; f32 is exact)."""
    w1, b1 = _fold_bn_oihw(params["w1"], params["g1"], params["be1"],
                           params["m1"], params["v1"])
    w2, b2 = _fold_bn_oihw(params["w2"], params["g2"], params["be2"],
                           params["m2"], params["v2"])

    def conv(z, w):
        return jax.lax.conv_general_dilated(
            z.astype(matmul_dtype), w.astype(matmul_dtype),
            window_strides=(1, 1), padding=((1, 1), (1, 1)),
            dimension_numbers=("NCHW", "OIHW", "NCHW"),
            preferred_element_type=jnp.float32)

    y1 = jax.nn.relu(conv(x, w1) + b1[None, :, None, None])
    y2 = conv(y1, w2) + b2[None, :, None, None]
    return jax.nn.relu(y1 + y2)


# ------------------------------ parameter init ------------------------------ #
def init_params(key, in_ch, out_ch):
    ks = jax.random.split(key, 10)
    f32 = jnp.float32
    return {
        # conv1: Conv2d(in_ch, out_ch, 3, pad=1, bias=False) + BatchNorm2d(out_ch)
        "w1": 0.1 * jax.random.normal(ks[0], (out_ch, in_ch, 3, 3), f32),
        "g1": 1.0 + 0.1 * jax.random.normal(ks[1], (out_ch,), f32),
        "be1": 0.1 * jax.random.normal(ks[2], (out_ch,), f32),
        "m1": 0.05 * jax.random.normal(ks[3], (out_ch,), f32),
        "v1": 1.0 + 0.2 * jax.random.uniform(ks[4], (out_ch,), f32),
        # conv2: Conv2d(out_ch, out_ch, 3, pad=1, bias=False) + BatchNorm2d(out_ch)
        "w2": 0.1 * jax.random.normal(ks[5], (out_ch, out_ch, 3, 3), f32),
        "g2": 1.0 + 0.1 * jax.random.normal(ks[6], (out_ch,), f32),
        "be2": 0.1 * jax.random.normal(ks[7], (out_ch,), f32),
        "m2": 0.05 * jax.random.normal(ks[8], (out_ch,), f32),
        "v2": 1.0 + 0.2 * jax.random.uniform(ks[9], (out_ch,), f32),
    }


if __name__ == "__main__":
    key = jax.random.PRNGKey(0)
    kx, kp = jax.random.split(key)

    N, in_ch, out_ch = 2, 4, 8
    H = W = 16
    x = jax.random.normal(kx, (N, in_ch, H, W), jnp.float32)
    params = init_params(kp, in_ch, out_ch)

    out = jax.block_until_ready(jax.jit(simple_res_block)(x, params))
    assert out.shape == (N, out_ch, H, W)

    # tight check against a reference with matching (bf16-matmul, f32-accumulate) numerics
    ref_bf16 = jax.block_until_ready(simple_res_block_ref(x, params, jnp.bfloat16))
    err_b = float(jnp.max(jnp.abs(out - ref_bf16)))
    assert jnp.allclose(out, ref_bf16, atol=2e-3, rtol=2e-3), err_b

    # loose sanity check against the full-f32 reference (bf16 MXU rounding only)
    ref_f32 = jax.block_until_ready(simple_res_block_ref(x, params, jnp.float32))
    err_f = float(jnp.max(jnp.abs(out - ref_f32)))
    assert jnp.allclose(out, ref_f32, atol=5e-2, rtol=5e-2), err_f

    print("KERNEL_OK")
</pallas_src>

<mosaic_0001>
module attributes {stable_mosaic.version = 11 : i64} {
  func.func @_resblock_kernel(%arg0: i32, %arg1: memref<2x16x256xbf16, #tpu.memory_space<vmem>>, %arg2: memref<16x144xbf16, #tpu.memory_space<vmem>>, %arg3: memref<16x1xf32, #tpu.memory_space<vmem>>, %arg4: memref<16x144xbf16, #tpu.memory_space<vmem>>, %arg5: memref<16x1xf32, #tpu.memory_space<vmem>>, %arg6: memref<2x16x256xf32, #tpu.memory_space<vmem>>) attributes {dimension_semantics = [#tpu.dimension_semantics<parallel>], iteration_bounds = array<i64: 1>, scalar_prefetch = 0 : i64, scratch_operands = 0 : i64, tpu.core_type = #tpu.core_type<tc>, window_params = [{transform_indices = @transform_0, window_bounds = array<i64: 2, 16, 256>}, {pipeline_mode = #tpu.pipeline_mode<synchronous>, transform_indices = @transform_1, window_bounds = array<i64: 16, 144>}, {pipeline_mode = #tpu.pipeline_mode<synchronous>, transform_indices = @transform_2, window_bounds = array<i64: 16, 1>}, {pipeline_mode = #tpu.pipeline_mode<synchronous>, transform_indices = @transform_3, window_bounds = array<i64: 16, 144>}, {pipeline_mode = #tpu.pipeline_mode<synchronous>, transform_indices = @transform_4, window_bounds = array<i64: 16, 1>}, {transform_indices = @transform_5, window_bounds = array<i64: 2, 16, 256>}]} {
    %0 = tpu.iota {dimensions = array<i32: 1>} : vector<1x512xi32>
    %c256_i32 = arith.constant 256 : i32
    %c0_i32 = arith.constant 0 : i32
    %1 = arith.cmpi eq, %c256_i32, %c0_i32 : i32
    %c1_i32 = arith.constant 1 : i32
    %2 = arith.select %1, %c1_i32, %c256_i32 : i32
    %3 = vector.broadcast %2 : i32 to vector<1x512xi32>
    %4 = arith.remsi %0, %3 : vector<1x512xi32>
    %c0_i32_0 = arith.constant 0 : i32
    %5 = vector.broadcast %c0_i32_0 : i32 to vector<1x512xi32>
    %6 = arith.cmpi ne, %4, %5 : vector<1x512xi32>
    %c0_i32_1 = arith.constant 0 : i32
    %7 = vector.broadcast %c0_i32_1 : i32 to vector<1x512xi32>
    %8 = arith.cmpi slt, %4, %7 : vector<1x512xi32>
    %c0_i32_2 = arith.constant 0 : i32
    %9 = arith.cmpi slt, %2, %c0_i32_2 : i32
    %10 = vector.broadcast %9 : i1 to vector<1x512xi1>
    %11 = vector.broadcast %10 : vector<1x512xi1> to vector<1x512xi1>
    %12 = arith.xori %8, %11 : vector<1x512xi1>
    %13 = arith.andi %12, %6 : vector<1x512xi1>
    %14 = vector.broadcast %2 : i32 to vector<1x512xi32>
    %15 = arith.addi %4, %14 : vector<1x512xi32>
    %16 = arith.select %13, %15, %4 : vector<1x512xi1>, vector<1x512xi32>
    %c16_i32 = arith.constant 16 : i32
    %c0_i32_3 = arith.constant 0 : i32
    %17 = arith.cmpi eq, %c16_i32, %c0_i32_3 : i32
    %c1_i32_4 = arith.constant 1 : i32
    %18 = arith.select %17, %c1_i32_4, %c16_i32 : i32
    %19 = vector.broadcast %18 : i32 to vector<1x512xi32>
    %20 = arith.remsi %16, %19 : vector<1x512xi32>
    %c0_i32_5 = arith.constant 0 : i32
    %21 = vector.broadcast %c0_i32_5 : i32 to vector<1x512xi32>
    %22 = arith.cmpi ne, %20, %21 : vector<1x512xi32>
    %c0_i32_6 = arith.constant 0 : i32
    %23 = vector.broadcast %c0_i32_6 : i32 to vector<1x512xi32>
    %24 = arith.cmpi slt, %20, %23 : vector<1x512xi32>
    %c0_i32_7 = arith.constant 0 : i32
    %25 = arith.cmpi slt, %18, %c0_i32_7 : i32
    %26 = vector.broadcast %25 : i1 to vector<1x512xi1>
    %27 = vector.broadcast %26 : vector<1x512xi1> to vector<1x512xi1>
    %28 = arith.xori %24, %27 : vector<1x512xi1>
    %29 = arith.andi %28, %22 : vector<1x512xi1>
    %30 = vector.broadcast %18 : i32 to vector<1x512xi32>
    %31 = arith.addi %20, %30 : vector<1x512xi32>
    %32 = arith.select %29, %31, %20 : vector<1x512xi1>, vector<1x512xi32>
    %c16_i32_8 = arith.constant 16 : i32
    %33 = vector.broadcast %c16_i32_8 : i32 to vector<1x512xi32>
    %34 = arith.cmpi sge, %16, %33 : vector<1x512xi32>
    %c240_i32 = arith.constant 240 : i32
    %35 = vector.broadcast %c240_i32 : i32 to vector<1x512xi32>
    %36 = arith.cmpi slt, %16, %35 : vector<1x512xi32>
    %c0_i32_9 = arith.constant 0 : i32
    %37 = vector.broadcast %c0_i32_9 : i32 to vector<1x512xi32>
    %38 = arith.cmpi sgt, %32, %37 : vector<1x512xi32>
    %c15_i32 = arith.constant 15 : i32
    %39 = vector.broadcast %c15_i32 : i32 to vector<1x512xi32>
    %40 = arith.cmpi slt, %32, %39 : vector<1x512xi32>
    %41 = arith.andi %34, %38 : vector<1x512xi1>
    %42 = arith.andi %34, %40 : vector<1x512xi1>
    %43 = arith.andi %36, %38 : vector<1x512xi1>
    %44 = arith.andi %36, %40 : vector<1x512xi1>
    %c0 = arith.constant 0 : index
    %c0_10 = arith.constant 0 : index
    %c0_11 = arith.constant 0 : index
    %45 = vector.load %arg1[%c0, %c0_10, %c0_11] : memref<2x16x256xbf16, #tpu.memory_space<vmem>>, vector<1x16x256xbf16>
    %46 = vector.shape_cast %45 : vector<1x16x256xbf16> to vector<16x256xbf16>
    %c1 = arith.constant 1 : index
    %c0_12 = arith.constant 0 : index
    %c0_13 = arith.constant 0 : index
    %47 = vector.load %arg1[%c1, %c0_12, %c0_13] : memref<2x16x256xbf16, #tpu.memory_space<vmem>>, vector<1x16x256xbf16>
    %48 = vector.shape_cast %47 : vector<1x16x256xbf16> to vector<16x256xbf16>
    %49 = tpu.concatenate %46, %48 in 1 : vector<16x256xbf16>, vector<16x256xbf16> -> vector<16x512xbf16>
    %50 = vector.extract_strided_slice %49 {offsets = [0, 495], sizes = [16, 17], strides = [1, 1]} : vector<16x512xbf16> to vector<16x17xbf16>
    %51 = vector.extract_strided_slice %49 {offsets = [0, 0], sizes = [16, 495], strides = [1, 1]} : vector<16x512xbf16> to vector<16x495xbf16>
    %52 = tpu.concatenate %50, %51 in 1 : vector<16x17xbf16>, vector<16x495xbf16> -> vector<16x512xbf16>
    %cst = arith.constant 0.000000e+00 : bf16
    %53 = vector.broadcast %cst : bf16 to vector<16x512xbf16>
    %54 = vector.shape_cast %41 : vector<1x512xi1> to vector<1x512xi1>
    %55 = vector.broadcast %54 : vector<1x512xi1> to vector<16x512xi1>
    %56 = arith.select %55, %52, %53 : vector<16x512xi1>, vector<16x512xbf16>
    %57 = vector.extract_strided_slice %49 {offsets = [0, 496], sizes = [16, 16], strides = [1, 1]} : vector<16x512xbf16> to vector<16x16xbf16>
    %58 = vector.extract_strided_slice %49 {offsets = [0, 0], sizes = [16, 496], strides = [1, 1]} : vector<16x512xbf16> to vector<16x496xbf16>
    %59 = tpu.concatenate %57, %58 in 1 : vector<16x16xbf16>, vector<16x496xbf16> -> vector<16x512xbf16>
    %cst_14 = arith.constant 0.000000e+00 : bf16
    %60 = vector.broadcast %cst_14 : bf16 to vector<16x512xbf16>
    %61 = vector.shape_cast %34 : vector<1x512xi1> to vector<1x512xi1>
    %62 = vector.broadcast %61 : vector<1x512xi1> to vector<16x512xi1>
    %63 = arith.select %62, %59, %60 : vector<16x512xi1>, vector<16x512xbf16>
    %64 = vector.extract_strided_slice %49 {offsets = [0, 497], sizes = [16, 15], strides = [1, 1]} : vector<16x512xbf16> to vector<16x15xbf16>
    %65 = vector.extract_strided_slice %49 {offsets = [0, 0], sizes = [16, 497], strides = [1, 1]} : vector<16x512xbf16> to vector<16x497xbf16>
    %66 = tpu.concatenate %64, %65 in 1 : vector<16x15xbf16>, vector<16x497xbf16> -> vector<16x512xbf16>
    %cst_15 = arith.constant 0.000000e+00 : bf16
    %67 = vector.broadcast %cst_15 : bf16 to vector<16x512xbf16>
    %68 = vector.shape_cast %42 : vector<1x512xi1> to vector<1x512xi1>
    %69 = vector.broadcast %68 : vector<1x512xi1> to vector<16x512xi1>
    %70 = arith.select %69, %66, %67 : vector<16x512xi1>, vector<16x512xbf16>
    %71 = vector.extract_strided_slice %49 {offsets = [0, 511], sizes = [16, 1], strides = [1, 1]} : vector<16x512xbf16> to vector<16x1xbf16>
    %72 = vector.extract_strided_slice %49 {offsets = [0, 0], sizes = [16, 511], strides = [1, 1]} : vector<16x512xbf16> to vector<16x511xbf16>
    %73 = tpu.concatenate %71, %72 in 1 : vector<16x1xbf16>, vector<16x511xbf16> -> vector<16x512xbf16>
    %cst_16 = arith.constant 0.000000e+00 : bf16
    %74 = vector.broadcast %cst_16 : bf16 to vector<16x512xbf16>
    %75 = vector.shape_cast %38 : vector<1x512xi1> to vector<1x512xi1>
    %76 = vector.broadcast %75 : vector<1x512xi1> to vector<16x512xi1>
    %77 = arith.select %76, %73, %74 : vector<16x512xi1>, vector<16x512xbf16>
    %78 = vector.extract_strided_slice %49 {offsets = [0, 1], sizes = [16, 511], strides = [1, 1]} : vector<16x512xbf16> to vector<16x511xbf16>
    %79 = vector.extract_strided_slice %49 {offsets = [0, 0], sizes = [16, 1], strides = [1, 1]} : vector<16x512xbf16> to vector<16x1xbf16>
    %80 = tpu.concatenate %78, %79 in 1 : vector<16x511xbf16>, vector<16x1xbf16> -> vector<16x512xbf16>
    %cst_17 = arith.constant 0.000000e+00 : bf16
    %81 = vector.broadcast %cst_17 : bf16 to vector<16x512xbf16>
    %82 = vector.shape_cast %40 : vector<1x512xi1> to vector<1x512xi1>
    %83 = vector.broadcast %82 : vector<1x512xi1> to vector<16x512xi1>
    %84 = arith.select %83, %80, %81 : vector<16x512xi1>, vector<16x512xbf16>
    %85 = vector.extract_strided_slice %49 {offsets = [0, 15], sizes = [16, 497], strides = [1, 1]} : vector<16x512xbf16> to vector<16x497xbf16>
    %86 = vector.extract_strided_slice %49 {offsets = [0, 0], sizes = [16, 15], strides = [1, 1]} : vector<16x512xbf16> to vector<16x15xbf16>
    %87 = tpu.concatenate %85, %86 in 1 : vector<16x497xbf16>, vector<16x15xbf16> -> vector<16x512xbf16>
    %cst_18 = arith.constant 0.000000e+00 : bf16
    %88 = vector.broadcast %cst_18 : bf16 to vector<16x512xbf16>
    %89 = vector.shape_cast %43 : vector<1x512xi1> to vector<1x512xi1>
    %90 = vector.broadcast %89 : vector<1x512xi1> to vector<16x512xi1>
    %91 = arith.select %90, %87, %88 : vector<16x512xi1>, vector<16x512xbf16>
    %92 = vector.extract_strided_slice %49 {offsets = [0, 16], sizes = [16, 496], strides = [1, 1]} : vector<16x512xbf16> to vector<16x496xbf16>
    %93 = vector.extract_strided_slice %49 {offsets = [0, 0], sizes = [16, 16], strides = [1, 1]} : vector<16x512xbf16> to vector<16x16xbf16>
    %94 = tpu.concatenate %92, %93 in 1 : vector<16x496xbf16>, vector<16x16xbf16> -> vector<16x512xbf16>
    %cst_19 = arith.constant 0.000000e+00 : bf16
    %95 = vector.broadcast %cst_19 : bf16 to vector<16x512xbf16>
    %96 = vector.shape_cast %36 : vector<1x512xi1> to vector<1x512xi1>
    %97 = vector.broadcast %96 : vector<1x512xi1> to vector<16x512xi1>
    %98 = arith.select %97, %94, %95 : vector<16x512xi1>, vector<16x512xbf16>
    %99 = vector.extract_strided_slice %49 {offsets = [0, 17], sizes = [16, 495], strides = [1, 1]} : vector<16x512xbf16> to vector<16x495xbf16>
    %100 = vector.extract_strided_slice %49 {offsets = [0, 0], sizes = [16, 17], strides = [1, 1]} : vector<16x512xbf16> to vector<16x17xbf16>
    %101 = tpu.concatenate %99, %100 in 1 : vector<16x495xbf16>, vector<16x17xbf16> -> vector<16x512xbf16>
    %cst_20 = arith.constant 0.000000e+00 : bf16
    %102 = vector.broadcast %cst_20 : bf16 to vector<16x512xbf16>
    %103 = vector.shape_cast %44 : vector<1x512xi1> to vector<1x512xi1>
    %104 = vector.broadcast %103 : vector<1x512xi1> to vector<16x512xi1>
    %105 = arith.select %104, %101, %102 : vector<16x512xi1>, vector<16x512xbf16>
    %106 = tpu.concatenate %56, %63, %70, %77, %49, %84, %91, %98, %105 in 0 : vector<16x512xbf16>, vector<16x512xbf16>, vector<16x512xbf16>, vector<16x512xbf16>, vector<16x512xbf16>, vector<16x512xbf16>, vector<16x512xbf16>, vector<16x512xbf16>, vector<16x512xbf16> -> vector<144x512xbf16>
    %c0_21 = arith.constant 0 : index
    %c0_22 = arith.constant 0 : index
    %107 = vector.load %arg2[%c0_21, %c0_22] : memref<16x144xbf16, #tpu.memory_space<vmem>>, vector<16x144xbf16>
    %cst_23 = arith.constant dense<0.000000e+00> : vector<16x512xf32>
    %108 = tpu.matmul %107, %106, %cst_23 {dimension_numbers = #tpu.dot_dimension_numbers<[1], [0], [0], [1], [0, 0, 1, 1], [], []>} : vector<16x144xbf16>, vector<144x512xbf16>, vector<16x512xf32> -> vector<16x512xf32>
    %c0_24 = arith.constant 0 : index
    %c0_25 = arith.constant 0 : index
    %109 = vector.load %arg3[%c0_24, %c0_25] : memref<16x1xf32, #tpu.memory_space<vmem>>, vector<16x1xf32>
    %110 = vector.broadcast %109 : vector<16x1xf32> to vector<16x512xf32>
    %111 = arith.addf %108, %110 : vector<16x512xf32>
    %cst_26 = arith.constant 0.000000e+00 : f32
    %112 = vector.broadcast %cst_26 : f32 to vector<16x512xf32>
    %113 = arith.maximumf %111, %112 : vector<16x512xf32>
    %114 = arith.truncf %113 : vector<16x512xf32> to vector<16x512xbf16>
    %115 = vector.extract_strided_slice %114 {offsets = [0, 495], sizes = [16, 17], strides = [1, 1]} : vector<16x512xbf16> to vector<16x17xbf16>
    %116 = vector.extract_strided_slice %114 {offsets = [0, 0], sizes = [16, 495], strides = [1, 1]} : vector<16x512xbf16> to vector<16x495xbf16>
    %117 = tpu.concatenate %115, %116 in 1 : vector<16x17xbf16>, vector<16x495xbf16> -> vector<16x512xbf16>
    %cst_27 = arith.constant 0.000000e+00 : bf16
    %118 = vector.broadcast %cst_27 : bf16 to vector<16x512xbf16>
    %119 = vector.shape_cast %41 : vector<1x512xi1> to vector<1x512xi1>
    %120 = vector.broadcast %119 : vector<1x512xi1> to vector<16x512xi1>
    %121 = arith.select %120, %117, %118 : vector<16x512xi1>, vector<16x512xbf16>
    %122 = vector.extract_strided_slice %114 {offsets = [0, 496], sizes = [16, 16], strides = [1, 1]} : vector<16x512xbf16> to vector<16x16xbf16>
    %123 = vector.extract_strided_slice %114 {offsets = [0, 0], sizes = [16, 496], strides = [1, 1]} : vector<16x512xbf16> to vector<16x496xbf16>
    %124 = tpu.concatenate %122, %123 in 1 : vector<16x16xbf16>, vector<16x496xbf16> -> vector<16x512xbf16>
    %cst_28 = arith.constant 0.000000e+00 : bf16
    %125 = vector.broadcast %cst_28 : bf16 to vector<16x512xbf16>
    %126 = vector.shape_cast %34 : vector<1x512xi1> to vector<1x512xi1>
    %127 = vector.broadcast %126 : vector<1x512xi1> to vector<16x512xi1>
    %128 = arith.select %127, %124, %125 : vector<16x512xi1>, vector<16x512xbf16>
    %129 = vector.extract_strided_slice %114 {offsets = [0, 497], sizes = [16, 15], strides = [1, 1]} : vector<16x512xbf16> to vector<16x15xbf16>
    %130 = vector.extract_strided_slice %114 {offsets = [0, 0], sizes = [16, 497], strides = [1, 1]} : vector<16x512xbf16> to vector<16x497xbf16>
    %131 = tpu.concatenate %129, %130 in 1 : vector<16x15xbf16>, vector<16x497xbf16> -> vector<16x512xbf16>
    %cst_29 = arith.constant 0.000000e+00 : bf16
    %132 = vector.broadcast %cst_29 : bf16 to vector<16x512xbf16>
    %133 = vector.shape_cast %42 : vector<1x512xi1> to vector<1x512xi1>
    %134 = vector.broadcast %133 : vector<1x512xi1> to vector<16x512xi1>
    %135 = arith.select %134, %131, %132 : vector<16x512xi1>, vector<16x512xbf16>
    %136 = vector.extract_strided_slice %114 {offsets = [0, 511], sizes = [16, 1], strides = [1, 1]} : vector<16x512xbf16> to vector<16x1xbf16>
    %137 = vector.extract_strided_slice %114 {offsets = [0, 0], sizes = [16, 511], strides = [1, 1]} : vector<16x512xbf16> to vector<16x511xbf16>
    %138 = tpu.concatenate %136, %137 in 1 : vector<16x1xbf16>, vector<16x511xbf16> -> vector<16x512xbf16>
    %cst_30 = arith.constant 0.000000e+00 : bf16
    %139 = vector.broadcast %cst_30 : bf16 to vector<16x512xbf16>
    %140 = vector.shape_cast %38 : vector<1x512xi1> to vector<1x512xi1>
    %141 = vector.broadcast %140 : vector<1x512xi1> to vector<16x512xi1>
    %142 = arith.select %141, %138, %139 : vector<16x512xi1>, vector<16x512xbf16>
    %143 = vector.extract_strided_slice %114 {offsets = [0, 1], sizes = [16, 511], strides = [1, 1]} : vector<16x512xbf16> to vector<16x511xbf16>
    %144 = vector.extract_strided_slice %114 {offsets = [0, 0], sizes = [16, 1], strides = [1, 1]} : vector<16x512xbf16> to vector<16x1xbf16>
    %145 = tpu.concatenate %143, %144 in 1 : vector<16x511xbf16>, vector<16x1xbf16> -> vector<16x512xbf16>
    %cst_31 = arith.constant 0.000000e+00 : bf16
    %146 = vector.broadcast %cst_31 : bf16 to vector<16x512xbf16>
    %147 = vector.shape_cast %40 : vector<1x512xi1> to vector<1x512xi1>
    %148 = vector.broadcast %147 : vector<1x512xi1> to vector<16x512xi1>
    %149 = arith.select %148, %145, %146 : vector<16x512xi1>, vector<16x512xbf16>
    %150 = vector.extract_strided_slice %114 {offsets = [0, 15], sizes = [16, 497], strides = [1, 1]} : vector<16x512xbf16> to vector<16x497xbf16>
    %151 = vector.extract_strided_slice %114 {offsets = [0, 0], sizes = [16, 15], strides = [1, 1]} : vector<16x512xbf16> to vector<16x15xbf16>
    %152 = tpu.concatenate %150, %151 in 1 : vector<16x497xbf16>, vector<16x15xbf16> -> vector<16x512xbf16>
    %cst_32 = arith.constant 0.000000e+00 : bf16
    %153 = vector.broadcast %cst_32 : bf16 to vector<16x512xbf16>
    %154 = vector.shape_cast %43 : vector<1x512xi1> to vector<1x512xi1>
    %155 = vector.broadcast %154 : vector<1x512xi1> to vector<16x512xi1>
    %156 = arith.select %155, %152, %153 : vector<16x512xi1>, vector<16x512xbf16>
    %157 = vector.extract_strided_slice %114 {offsets = [0, 16], sizes = [16, 496], strides = [1, 1]} : vector<16x512xbf16> to vector<16x496xbf16>
    %158 = vector.extract_strided_slice %114 {offsets = [0, 0], sizes = [16, 16], strides = [1, 1]} : vector<16x512xbf16> to vector<16x16xbf16>
    %159 = tpu.concatenate %157, %158 in 1 : vector<16x496xbf16>, vector<16x16xbf16> -> vector<16x512xbf16>
    %cst_33 = arith.constant 0.000000e+00 : bf16
    %160 = vector.broadcast %cst_33 : bf16 to vector<16x512xbf16>
    %161 = vector.shape_cast %36 : vector<1x512xi1> to vector<1x512xi1>
    %162 = vector.broadcast %161 : vector<1x512xi1> to vector<16x512xi1>
    %163 = arith.select %162, %159, %160 : vector<16x512xi1>, vector<16x512xbf16>
    %164 = vector.extract_strided_slice %114 {offsets = [0, 17], sizes = [16, 495], strides = [1, 1]} : vector<16x512xbf16> to vector<16x495xbf16>
    %165 = vector.extract_strided_slice %114 {offsets = [0, 0], sizes = [16, 17], strides = [1, 1]} : vector<16x512xbf16> to vector<16x17xbf16>
    %166 = tpu.concatenate %164, %165 in 1 : vector<16x495xbf16>, vector<16x17xbf16> -> vector<16x512xbf16>
    %cst_34 = arith.constant 0.000000e+00 : bf16
    %167 = vector.broadcast %cst_34 : bf16 to vector<16x512xbf16>
    %168 = vector.shape_cast %44 : vector<1x512xi1> to vector<1x512xi1>
    %169 = vector.broadcast %168 : vector<1x512xi1> to vector<16x512xi1>
    %170 = arith.select %169, %166, %167 : vector<16x512xi1>, vector<16x512xbf16>
    %171 = tpu.concatenate %121, %128, %135, %142, %114, %149, %156, %163, %170 in 0 : vector<16x512xbf16>, vector<16x512xbf16>, vector<16x512xbf16>, vector<16x512xbf16>, vector<16x512xbf16>, vector<16x512xbf16>, vector<16x512xbf16>, vector<16x512xbf16>, vector<16x512xbf16> -> vector<144x512xbf16>
    %c0_35 = arith.constant 0 : index
    %c0_36 = arith.constant 0 : index
    %172 = vector.load %arg4[%c0_35, %c0_36] : memref<16x144xbf16, #tpu.memory_space<vmem>>, vector<16x144xbf16>
    %cst_37 = arith.constant dense<0.000000e+00> : vector<16x512xf32>
    %173 = tpu.matmul %172, %171, %cst_37 {dimension_numbers = #tpu.dot_dimension_numbers<[1], [0], [0], [1], [0, 0, 1, 1], [], []>} : vector<16x144xbf16>, vector<144x512xbf16>, vector<16x512xf32> -> vector<16x512xf32>
    %c0_38 = arith.constant 0 : index
    %c0_39 = arith.constant 0 : index
    %174 = vector.load %arg5[%c0_38, %c0_39] : memref<16x1xf32, #tpu.memory_space<vmem>>, vector<16x1xf32>
    %175 = vector.broadcast %174 : vector<16x1xf32> to vector<16x512xf32>
    %176 = arith.addf %173, %175 : vector<16x512xf32>
    %177 = arith.addf %113, %176 : vector<16x512xf32>
    %cst_40 = arith.constant 0.000000e+00 : f32
    %178 = vector.broadcast %cst_40 : f32 to vector<16x512xf32>
    %179 = arith.maximumf %177, %178 : vector<16x512xf32>
    %180 = vector.extract_strided_slice %179 {offsets = [0, 0], sizes = [16, 256], strides = [1, 1]} : vector<16x512xf32> to vector<16x256xf32>
    %c0_41 = arith.constant 0 : index
    %c0_42 = arith.constant 0 : index
    %c0_43 = arith.constant 0 : index
    %181 = vector.load %arg6[%c0_41, %c0_42, %c0_43] : memref<2x16x256xf32, #tpu.memory_space<vmem>>, vector<1x16x256xf32>
    %182 = vector.shape_cast %181 : vector<1x16x256xf32> to vector<16x256xf32>
    %183 = vector.shape_cast %180 : vector<16x256xf32> to vector<1x16x256xf32>
    tpu.vector_store %arg6[%c0_41, %c0_42, %c0_43], %183 {strides = array<i32>} : memref<2x16x256xf32, #tpu.memory_space<vmem>>, vector<1x16x256xf32>,
    %184 = vector.extract_strided_slice %179 {offsets = [0, 256], sizes = [16, 256], strides = [1, 1]} : vector<16x512xf32> to vector<16x256xf32>
    %c1_44 = arith.constant 1 : index
    %c0_45 = arith.constant 0 : index
    %c0_46 = arith.constant 0 : index
    %185 = vector.load %arg6[%c1_44, %c0_45, %c0_46] : memref<2x16x256xf32, #tpu.memory_space<vmem>>, vector<1x16x256xf32>
    %186 = vector.shape_cast %185 : vector<1x16x256xf32> to vector<16x256xf32>
    %187 = vector.shape_cast %184 : vector<16x256xf32> to vector<1x16x256xf32>
    tpu.vector_store %arg6[%c1_44, %c0_45, %c0_46], %187 {strides = array<i32>} : memref<2x16x256xf32, #tpu.memory_space<vmem>>, vector<1x16x256xf32>,
    return
  }
  func.func @transform_0(%arg0: i32) -> (i32, i32, i32) {
    %c0_i32 = arith.constant 0 : i32
    %c0_i32_0 = arith.constant 0 : i32
    %c0_i32_1 = arith.constant 0 : i32
    return %arg0, %c0_i32, %c0_i32_0 : i32, i32, i32
  }
  func.func @transform_1(%arg0: i32) -> (i32, i32) {
    %c0_i32 = arith.constant 0 : i32
    %c0_i32_0 = arith.constant 0 : i32
    %c0_i32_1 = arith.constant 0 : i32
    return %c0_i32, %c0_i32_0 : i32, i32
  }
  func.func @transform_2(%arg0: i32) -> (i32, i32) {
    %c0_i32 = arith.constant 0 : i32
    %c0_i32_0 = arith.constant 0 : i32
    %c0_i32_1 = arith.constant 0 : i32
    return %c0_i32, %c0_i32_0 : i32, i32
  }
  func.func @transform_3(%arg0: i32) -> (i32, i32) {
    %c0_i32 = arith.constant 0 : i32
    %c0_i32_0 = arith.constant 0 : i32
    %c0_i32_1 = arith.constant 0 : i32
    return %c0_i32, %c0_i32_0 : i32, i32
  }
  func.func @transform_4(%arg0: i32) -> (i32, i32) {
    %c0_i32 = arith.constant 0 : i32
    %c0_i32_0 = arith.constant 0 : i32
    %c0_i32_1 = arith.constant 0 : i32
    return %c0_i32, %c0_i32_0 : i32, i32
  }
  func.func @transform_5(%arg0: i32) -> (i32, i32, i32) {
    %c0_i32 = arith.constant 0 : i32
    %c0_i32_0 = arith.constant 0 : i32
    %c0_i32_1 = arith.constant 0 : i32
    return %arg0, %c0_i32, %c0_i32_0 : i32, i32, i32
  }
}

</mosaic_0001>

<llo_original>
// kernel: simple_res_block.1
$region0: #{simple_res_block.1}
  #allocation0 [shape = 'u32[]', space=smem, size = 0x4, offset = 0x4, fixed_abs, tag = 'smem constant byte address 0x4 - core index']
  #allocation1 [shape = 'u32[144,128]{1,0:T(1,128)}', space=vmem, size = 0x12000, scoped, tag = 'internal scratch']
  %s0 = inlined_call_operand.vmem [shape: bf16[2,16,256], index: 0, kind: input, shape index: {}]
  %s1 = inlined_call_operand.vmem [shape: bf16[16,144], index: 1, kind: input, shape index: {}]
  %s2 = inlined_call_operand.vmem [shape: f32[16,1], index: 2, kind: input, shape index: {}]
  %s3 = inlined_call_operand.vmem [shape: bf16[16,144], index: 3, kind: input, shape index: {}]
  %s4 = inlined_call_operand.vmem [shape: f32[16,1], index: 4, kind: input, shape index: {}]
  %s5 = inlined_call_operand.vmem [shape: f32[2,16,256], index: 5, kind: output, shape index: {}]
  %s6 = sld [smem:[#allocation0]]
  $region30: #{simple_res_block.1} parent=0
    _
  %s8 = ssub.s32 1, %s6
  %s9 = scalar_select 0, %s8, %s6
  // Predicated region
  $region2: #{simple_res_block.1} parent=0 // pred_check
    _
  $region3: #{simple_res_block.1} parent=0 // pred_check_branch
    %11 = sbr.rel (0) target = $region5
  $region4: #{simple_res_block.1} parent=0 // pred_region
    _
  $region5: #{simple_res_block.1} parent=0 // pred_fallthru
    _
  // Predicated region
  $region6: #{simple_res_block.1} parent=0 // pred_check
    _
  $region7: #{simple_res_block.1} parent=0 // pred_check_branch
    %13 = sbr.rel (0) target = $region9
  $region8: #{simple_res_block.1} parent=0 // pred_region
    _
  $region9: #{simple_res_block.1} parent=0 // pred_fallthru
    _
  // Predicated region
  $region10: #{simple_res_block.1} parent=0 // pred_check
    _
  $region11: #{simple_res_block.1} parent=0 // pred_check_branch
    %15 = sbr.rel (0) target = $region13
  $region12: #{simple_res_block.1} parent=0 // pred_region
    _
  $region13: #{simple_res_block.1} parent=0 // pred_fallthru
    _
  // Predicated region
  $region14: #{simple_res_block.1} parent=0 // pred_check
    _
  $region15: #{simple_res_block.1} parent=0 // pred_check_branch
    %17 = sbr.rel (0) target = $region17
  $region16: #{simple_res_block.1} parent=0 // pred_region
    _
  $region17: #{simple_res_block.1} parent=0 // pred_fallthru
    _
  // Predicated region
  $region18: #{simple_res_block.1} parent=0 // pred_check
    _
  $region19: #{simple_res_block.1} parent=0 // pred_check_branch
    %19 = sbr.rel (0) target = $region21
  $region20: #{simple_res_block.1} parent=0 // pred_region
    _
  $region21: #{simple_res_block.1} parent=0 // pred_fallthru
    _
  %v23 = vlaneseq
  %v24 = vand.u32 %v23, 127
  %v25 = vadd.s32 %v24, 128
  %v26 = vadd.s32 %v24, 256
  %v27 = vadd.s32 %v24, 384
  %vm28 = vcmp.lt.s32.totalorder %v24, 0
  %v29 = vsub.s32 0, %v24
  %v30 = vsel %vm28, %v29, %v24
  %v31 = vshrl.u32 %v30, 8
  %v32 = vand.u32 %v30, 255
  %v33 = vsub.s32 0, %v32
  %v34 = vsel %vm28, %v33, %v32
  %vm35 = vcmp.lt.s32.totalorder %v25, 0
  %v36 = vsub.s32 0, %v25
  %v37 = vsel %vm35, %v36, %v25
  %v38 = vshrl.u32 %v37, 8
  %v39 = vand.u32 %v37, 255
  %v40 = vsub.s32 0, %v39
  %v41 = vsel %vm35, %v40, %v39
  %vm42 = vcmp.lt.s32.totalorder %v26, 0
  %v43 = vsub.s32 0, %v26
  %v44 = vsel %vm42, %v43, %v26
  %v45 = vshrl.u32 %v44, 8
  %v46 = vand.u32 %v44, 255
  %v47 = vsub.s32 0, %v46
  %v48 = vsel %vm42, %v47, %v46
  %vm49 = vcmp.lt.s32.totalorder %v27, 0
  %v50 = vsub.s32 0, %v27
  %v51 = vsel %vm49, %v50, %v27
  %v52 = vshrl.u32 %v51, 8
  %v53 = vand.u32 %v51, 255
  %v54 = vsub.s32 0, %v53
  %v55 = vsel %vm49, %v54, %v53
  %vm56 = vcmp.ne.s32.totalorder %v34, 0
  %vm57 = vcmp.ne.s32.totalorder %v41, 0
  %vm58 = vcmp.ne.s32.totalorder %v48, 0
  %vm59 = vcmp.ne.s32.totalorder %v55, 0
  %vm60 = vcmp.lt.s32.totalorder %v34, 0
  %vm61 = vcmp.lt.s32.totalorder %v41, 0
  %vm62 = vcmp.lt.s32.totalorder %v48, 0
  %vm63 = vcmp.lt.s32.totalorder %v55, 0
  %vm64 = vmand %vm60, %vm56
  %vm65 = vmand %vm61, %vm57
  %vm66 = vmand %vm62, %vm58
  %vm67 = vmand %vm63, %vm59
  %v68 = vadd.s32 %v34, 256
  %v69 = vadd.s32 %v41, 256
  %v70 = vadd.s32 %v48, 256
  %v71 = vadd.s32 %v55, 256
  %v72 = vsel %vm64, %v68, %v34
  %v73 = vsel %vm65, %v69, %v41
  %v74 = vsel %vm66, %v70, %v48
  %v75 = vsel %vm67, %v71, %v55
  %vm76 = vcmp.lt.s32.totalorder %v72, 0
  %v77 = vsub.s32 0, %v72
  %v78 = vsel %vm76, %v77, %v72
  %v79 = vshrl.u32 %v78, 4
  %v80 = vand.u32 %v78, 15
  %v81 = vsub.s32 0, %v80
  %v82 = vsel %vm76, %v81, %v80
  %vm83 = vcmp.lt.s32.totalorder %v73, 0
  %v84 = vsub.s32 0, %v73
  %v85 = vsel %vm83, %v84, %v73
  %v86 = vshrl.u32 %v85, 4
  %v87 = vand.u32 %v85, 15
  %v88 = vsub.s32 0, %v87
  %v89 = vsel %vm83, %v88, %v87
  %vm90 = vcmp.lt.s32.totalorder %v74, 0
  %v91 = vsub.s32 0, %v74
  %v92 = vsel %vm90, %v91, %v74
  %v93 = vshrl.u32 %v92, 4
  %v94 = vand.u32 %v92, 15
  %v95 = vsub.s32 0, %v94
  %v96 = vsel %vm90, %v95, %v94
  %vm97 = vcmp.lt.s32.totalorder %v75, 0
  %v98 = vsub.s32 0, %v75
  %v99 = vsel %vm97, %v98, %v75
  %v100 = vshrl.u32 %v99, 4
  %v101 = vand.u32 %v99, 15
  %v102 = vsub.s32 0, %v101
  %v103 = vsel %vm97, %v102, %v101
  %vm104 = vcmp.ne.s32.totalorder %v82, 0
  %vm105 = vcmp.ne.s32.totalorder %v89, 0
  %vm106 = vcmp.ne.s32.totalorder %v96, 0
  %vm107 = vcmp.ne.s32.totalorder %v103, 0
  %vm108 = vcmp.lt.s32.totalorder %v82, 0
  %vm109 = vcmp.lt.s32.totalorder %v89, 0
  %vm110 = vcmp.lt.s32.totalorder %v96, 0
  %vm111 = vcmp.lt.s32.totalorder %v103, 0
  %vm112 = vmand %vm108, %vm104
  %vm113 = vmand %vm109, %vm105
  %vm114 = vmand %vm110, %vm106
  %vm115 = vmand %vm111, %vm107
  %v116 = vadd.s32 %v82, 16
  %v117 = vadd.s32 %v89, 16
  %v118 = vadd.s32 %v96, 16
  %v119 = vadd.s32 %v103, 16
  %v120 = vsel %vm112, %v116, %v82
  %v121 = vsel %vm113, %v117, %v89
  %v122 = vsel %vm114, %v118, %v96
  %v123 = vsel %vm115, %v119, %v103
  %vm124 = vcmp.ge.s32.totalorder %v72, 16
  %vm125 = vcmp.ge.s32.totalorder %v73, 16
  %vm126 = vcmp.ge.s32.totalorder %v74, 16
  %vm127 = vcmp.ge.s32.totalorder %v75, 16
  %vm128 = vcmp.lt.s32.totalorder %v72, 240
  %vm129 = vcmp.lt.s32.totalorder %v73, 240
  %vm130 = vcmp.lt.s32.totalorder %v74, 240
  %vm131 = vcmp.lt.s32.totalorder %v75, 240
  %vm132 = vcmp.gt.s32.totalorder %v120, 0
  %vm133 = vcmp.gt.s32.totalorder %v121, 0
  %vm134 = vcmp.gt.s32.totalorder %v122, 0
  %vm135 = vcmp.gt.s32.totalorder %v123, 0
  %vm136 = vcmp.lt.s32.totalorder %v120, 15
  %vm137 = vcmp.lt.s32.totalorder %v121, 15
  %vm138 = vcmp.lt.s32.totalorder %v122, 15
  %vm139 = vcmp.lt.s32.totalorder %v123, 15
  %vm140 = vmand %vm124, %vm132
  %vm141 = vmand %vm125, %vm133
  %vm142 = vmand %vm126, %vm134
  %vm143 = vmand %vm127, %vm135
  %vm144 = vmand %vm124, %vm136
  %vm145 = vmand %vm125, %vm137
  %vm146 = vmand %vm126, %vm138
  %vm147 = vmand %vm127, %vm139
  %vm148 = vmand %vm128, %vm132
  %vm149 = vmand %vm129, %vm133
  %vm150 = vmand %vm130, %vm134
  %vm151 = vmand %vm131, %vm135
  %vm152 = vmand %vm128, %vm136
  %vm153 = vmand %vm129, %vm137
  %vm154 = vmand %vm130, %vm138
  %vm155 = vmand %vm131, %vm139
  %v156 = vld [vmem:[%s0] sm:$0xff]
  %v157 = vld [vmem:[%s0 + $0x8] sm:$0xff]
  %s158 = scalar_lea.vmem %s0, 16
  %v159 = vld [vmem:[%s158] sm:$0xff]
  %v160 = vld [vmem:[%s158 + $0x8] sm:$0xff]
  %v163 = vunpack.c.l.b16 %v156
  %v164 = vunpack.c.h.b16 %v156
  %v165 = vunpack.c.l.b16 %v157
  %v166 = vunpack.c.h.b16 %v157
  %v167 = vpack.c.b16 %v165, %v163
  %v168 = vpack.c.b16 %v166, %v164
  %v173 = vunpack.c.l.b16 %v159
  %v174 = vunpack.c.h.b16 %v159
  %v175 = vunpack.c.l.b16 %v160
  %v176 = vunpack.c.h.b16 %v160
  %v177 = vpack.c.b16 %v175, %v173
  %v178 = vpack.c.b16 %v176, %v174
  %181 = vrot.lane.b32.xlu0 %v178, 17
  %v182 = vpop.permute.xlu0 %181
  %183 = vrot.lane.b32.xlu0 %v167, 17
  %v184 = vpop.permute.xlu0 %183
  %185 = vrot.lane.b32.xlu0 %v168, 17
  %v186 = vpop.permute.xlu0 %185
  %187 = vrot.lane.b32.xlu0 %v177, 17
  %v188 = vpop.permute.xlu0 %187
  %vm189 = vcmask 138240
  %v190 = vsel %vm189, %v184, %v186
  %v191 = vsel %vm189, %v186, %v188
  %v192 = vsel %vm189, %v188, %v182
  %vm196 = vcmask 138240
  %v199 = vsel %vm196, %v182, %v184
  %v201 = vsel %vm140, 1, 0
  %v202 = vsel %vm141, 1, 0
  %v203 = vsel %vm142, 1, 0
  %v204 = vsel %vm143, 1, 0
  %vm205 = vcmp.eq.s32.totalorder %v201, 1
  %vm206 = vcmp.eq.s32.totalorder %v202, 1
  %vm207 = vcmp.eq.s32.totalorder %v203, 1
  %vm208 = vcmp.eq.s32.totalorder %v204, 1
  %vm209 = vmpackc.low %vm206, %vm205
  %vm210 = vmpackc.low %vm208, %vm207
  %v211 = vsel %vm209, 65537, 0
  %v212 = vsel %vm210, 65537, 0
  %v213 = vlaneseq
  %v214 = vshrl.u32 %v213, 7
  %v215 = vsub.s32 0, %v214
  %v216 = vrot.slane %v211, %v215
  %v217 = vlaneseq
  %v218 = vshrl.u32 %v217, 7
  %v219 = vsub.s32 4, %v218
  %v220 = vrot.slane %v211, %v219
  %v221 = vlaneseq
  %v222 = vshrl.u32 %v221, 7
  %v223 = vsub.s32 0, %v222
  %v224 = vrot.slane %v212, %v223
  %v225 = vlaneseq
  %v226 = vshrl.u32 %v225, 7
  %v227 = vsub.s32 4, %v226
  %v228 = vrot.slane %v212, %v227
  %vm229 = vcmp.ne.s16.totalorder %v216, 0
  %vm230 = vcmp.ne.s16.totalorder %v220, 0
  %vm231 = vcmp.ne.s16.totalorder %v224, 0
  %vm232 = vcmp.ne.s16.totalorder %v228, 0
  %v233 = vsel %vm229, %v199, 0
  %v234 = vsel %vm230, %v190, 0
  %v235 = vsel %vm231, %v191, 0
  %v236 = vsel %vm232, %v192, 0
  %237 = vrot.lane.b32.xlu0 %v178, 16
  %v238 = vpop.permute.xlu0 %237
  %239 = vrot.lane.b32.xlu0 %v167, 16
  %v240 = vpop.permute.xlu0 %239
  %241 = vrot.lane.b32.xlu0 %v168, 16
  %v242 = vpop.permute.xlu0 %241
  %243 = vrot.lane.b32.xlu0 %v177, 16
  %v244 = vpop.permute.xlu0 %243
  %vm245 = vcmask 130048
  %v246 = vsel %vm245, %v240, %v242
  %v247 = vsel %vm245, %v242, %v244
  %v248 = vsel %vm245, %v244, %v238
  %vm252 = vcmask 130048
  %v255 = vsel %vm252, %v238, %v240
  %v257 = vsel %vm124, 1, 0
  %v258 = vsel %vm125, 1, 0
  %v259 = vsel %vm126, 1, 0
  %v260 = vsel %vm127, 1, 0
  %vm261 = vcmp.eq.s32.totalorder %v257, 1
  %vm262 = vcmp.eq.s32.totalorder %v258, 1
  %vm263 = vcmp.eq.s32.totalorder %v259, 1
  %vm264 = vcmp.eq.s32.totalorder %v260, 1
  %vm265 = vmpackc.low %vm262, %vm261
  %vm266 = vmpackc.low %vm264, %vm263
  %v267 = vsel %vm265, 65537, 0
  %v268 = vsel %vm266, 65537, 0
  %v269 = vlaneseq
  %v270 = vshrl.u32 %v269, 7
  %v271 = vsub.s32 0, %v270
  %v272 = vrot.slane %v267, %v271
  %v273 = vlaneseq
  %v274 = vshrl.u32 %v273, 7
  %v275 = vsub.s32 4, %v274
  %v276 = vrot.slane %v267, %v275
  %v277 = vlaneseq
  %v278 = vshrl.u32 %v277, 7
  %v279 = vsub.s32 0, %v278
  %v280 = vrot.slane %v268, %v279
  %v281 = vlaneseq
  %v282 = vshrl.u32 %v281, 7
  %v283 = vsub.s32 4, %v282
  %v284 = vrot.slane %v268, %v283
  %vm285 = vcmp.ne.s16.totalorder %v272, 0
  %vm286 = vcmp.ne.s16.totalorder %v276, 0
  %vm287 = vcmp.ne.s16.totalorder %v280, 0
  %vm288 = vcmp.ne.s16.totalorder %v284, 0
  %v289 = vsel %vm285, %v255, 0
  %v290 = vsel %vm286, %v246, 0
  %v291 = vsel %vm287, %v247, 0
  %v292 = vsel %vm288, %v248, 0
  %293 = vrot.lane.b32.xlu0 %v178, 15
  %v294 = vpop.permute.xlu0 %293
  %295 = vrot.lane.b32.xlu0 %v167, 15
  %v296 = vpop.permute.xlu0 %295
  %297 = vrot.lane.b32.xlu0 %v168, 15
  %v298 = vpop.permute.xlu0 %297
  %299 = vrot.lane.b32.xlu0 %v177, 15
  %v300 = vpop.permute.xlu0 %299
  %vm301 = vcmask 121856
  %v302 = vsel %vm301, %v296, %v298
  %v303 = vsel %vm301, %v298, %v300
  %v304 = vsel %vm301, %v300, %v294
  %vm308 = vcmask 121856
  %v311 = vsel %vm308, %v294, %v296
  %v313 = vsel %vm144, 1, 0
  %v314 = vsel %vm145, 1, 0
  %v315 = vsel %vm146, 1, 0
  %v316 = vsel %vm147, 1, 0
  %vm317 = vcmp.eq.s32.totalorder %v313, 1
  %vm318 = vcmp.eq.s32.totalorder %v314, 1
  %vm319 = vcmp.eq.s32.totalorder %v315, 1
  %vm320 = vcmp.eq.s32.totalorder %v316, 1
  %vm321 = vmpackc.low %vm318, %vm317
  %vm322 = vmpackc.low %vm320, %vm319
  %v323 = vsel %vm321, 65537, 0
  %v324 = vsel %vm322, 65537, 0
  %v325 = vlaneseq
  %v326 = vshrl.u32 %v325, 7
  %v327 = vsub.s32 0, %v326
  %v328 = vrot.slane %v323, %v327
  %v329 = vlaneseq
  %v330 = vshrl.u32 %v329, 7
  %v331 = vsub.s32 4, %v330
  %v332 = vrot.slane %v323, %v331
  %v333 = vlaneseq
  %v334 = vshrl.u32 %v333, 7
  %v335 = vsub.s32 0, %v334
  %v336 = vrot.slane %v324, %v335
  %v337 = vlaneseq
  %v338 = vshrl.u32 %v337, 7
  %v339 = vsub.s32 4, %v338
  %v340 = vrot.slane %v324, %v339
  %vm341 = vcmp.ne.s16.totalorder %v328, 0
  %vm342 = vcmp.ne.s16.totalorder %v332, 0
  %vm343 = vcmp.ne.s16.totalorder %v336, 0
  %vm344 = vcmp.ne.s16.totalorder %v340, 0
  %v345 = vsel %vm341, %v311, 0
  %v346 = vsel %vm342, %v302, 0
  %v347 = vsel %vm343, %v303, 0
  %v348 = vsel %vm344, %v304, 0
  %349 = vrot.lane.b32.xlu0 %v178, 1
  %v350 = vpop.permute.xlu0 %349
  %351 = vrot.lane.b32.xlu0 %v167, 1
  %v352 = vpop.permute.xlu0 %351
  %353 = vrot.lane.b32.xlu0 %v168, 1
  %v354 = vpop.permute.xlu0 %353
  %355 = vrot.lane.b32.xlu0 %v177, 1
  %v356 = vpop.permute.xlu0 %355
  %vm357 = vcmask 7168
  %v358 = vsel %vm357, %v352, %v354
  %v359 = vsel %vm357, %v354, %v356
  %v360 = vsel %vm357, %v356, %v350
  %vm364 = vcmask 7168
  %v367 = vsel %vm364, %v350, %v352
  %v369 = vsel %vm132, 1, 0
  %v370 = vsel %vm133, 1, 0
  %v371 = vsel %vm134, 1, 0
  %v372 = vsel %vm135, 1, 0
  %vm373 = vcmp.eq.s32.totalorder %v369, 1
  %vm374 = vcmp.eq.s32.totalorder %v370, 1
  %vm375 = vcmp.eq.s32.totalorder %v371, 1
  %vm376 = vcmp.eq.s32.totalorder %v372, 1
  %vm377 = vmpackc.low %vm374, %vm373
  %vm378 = vmpackc.low %vm376, %vm375
  %v379 = vsel %vm377, 65537, 0
  %v380 = vsel %vm378, 65537, 0
  %v381 = vlaneseq
  %v382 = vshrl.u32 %v381, 7
  %v383 = vsub.s32 0, %v382
  %v384 = vrot.slane %v379, %v383
  %v385 = vlaneseq
  %v386 = vshrl.u32 %v385, 7
  %v387 = vsub.s32 4, %v386
  %v388 = vrot.slane %v379, %v387
  %v389 = vlaneseq
  %v390 = vshrl.u32 %v389, 7
  %v391 = vsub.s32 0, %v390
  %v392 = vrot.slane %v380, %v391
  %v393 = vlaneseq
  %v394 = vshrl.u32 %v393, 7
  %v395 = vsub.s32 4, %v394
  %v396 = vrot.slane %v380, %v395
  %vm397 = vcmp.ne.s16.totalorder %v384, 0
  %vm398 = vcmp.ne.s16.totalorder %v388, 0
  %vm399 = vcmp.ne.s16.totalorder %v392, 0
  %vm400 = vcmp.ne.s16.totalorder %v396, 0
  %v401 = vsel %vm397, %v367, 0
  %v402 = vsel %vm398, %v358, 0
  %v403 = vsel %vm399, %v359, 0
  %v404 = vsel %vm400, %v360, 0
  %405 = vrot.lane.b32.xlu0 %v167, 127
  %v406 = vpop.permute.xlu0 %405
  %407 = vrot.lane.b32.xlu0 %v168, 127
  %v408 = vpop.permute.xlu0 %407
  %409 = vrot.lane.b32.xlu0 %v177, 127
  %v410 = vpop.permute.xlu0 %409
  %411 = vrot.lane.b32.xlu0 %v178, 127
  %v412 = vpop.permute.xlu0 %411
  %vm413 = vcmask 1039360
  %v414 = vsel %vm413, %v406, %v408
  %v415 = vsel %vm413, %v408, %v410
  %v416 = vsel %vm413, %v410, %v412
  %vm420 = vcmask 1039360
  %v423 = vsel %vm420, %v412, %v406
  %v425 = vsel %vm136, 1, 0
  %v426 = vsel %vm137, 1, 0
  %v427 = vsel %vm138, 1, 0
  %v428 = vsel %vm139, 1, 0
  %vm429 = vcmp.eq.s32.totalorder %v425, 1
  %vm430 = vcmp.eq.s32.totalorder %v426, 1
  %vm431 = vcmp.eq.s32.totalorder %v427, 1
  %vm432 = vcmp.eq.s32.totalorder %v428, 1
  %vm433 = vmpackc.low %vm430, %vm429
  %vm434 = vmpackc.low %vm432, %vm431
  %v435 = vsel %vm433, 65537, 0
  %v436 = vsel %vm434, 65537, 0
  %v437 = vlaneseq
  %v438 = vshrl.u32 %v437, 7
  %v439 = vsub.s32 0, %v438
  %v440 = vrot.slane %v435, %v439
  %v441 = vlaneseq
  %v442 = vshrl.u32 %v441, 7
  %v443 = vsub.s32 4, %v442
  %v444 = vrot.slane %v435, %v443
  %v445 = vlaneseq
  %v446 = vshrl.u32 %v445, 7
  %v447 = vsub.s32 0, %v446
  %v448 = vrot.slane %v436, %v447
  %v449 = vlaneseq
  %v450 = vshrl.u32 %v449, 7
  %v451 = vsub.s32 4, %v450
  %v452 = vrot.slane %v436, %v451
  %vm453 = vcmp.ne.s16.totalorder %v440, 0
  %vm454 = vcmp.ne.s16.totalorder %v444, 0
  %vm455 = vcmp.ne.s16.totalorder %v448, 0
  %vm456 = vcmp.ne.s16.totalorder %v452, 0
  %v457 = vsel %vm453, %v414, 0
  %v458 = vsel %vm454, %v415, 0
  %v459 = vsel %vm455, %v416, 0
  %v460 = vsel %vm456, %v423, 0
  %461 = vrot.lane.b32.xlu0 %v167, 113
  %v462 = vpop.permute.xlu0 %461
  %463 = vrot.lane.b32.xlu0 %v168, 113
  %v464 = vpop.permute.xlu0 %463
  %465 = vrot.lane.b32.xlu0 %v177, 113
  %v466 = vpop.permute.xlu0 %465
  %467 = vrot.lane.b32.xlu0 %v178, 113
  %v468 = vpop.permute.xlu0 %467
  %vm469 = vcmask 924672
  %v470 = vsel %vm469, %v462, %v464
  %v471 = vsel %vm469, %v464, %v466
  %v472 = vsel %vm469, %v466, %v468
  %vm476 = vcmask 924672
  %v479 = vsel %vm476, %v468, %v462
  %v481 = vsel %vm148, 1, 0
  %v482 = vsel %vm149, 1, 0
  %v483 = vsel %vm150, 1, 0
  %v484 = vsel %vm151, 1, 0
  %vm485 = vcmp.eq.s32.totalorder %v481, 1
  %vm486 = vcmp.eq.s32.totalorder %v482, 1
  %vm487 = vcmp.eq.s32.totalorder %v483, 1
  %vm488 = vcmp.eq.s32.totalorder %v484, 1
  %vm489 = vmpackc.low %vm486, %vm485
  %vm490 = vmpackc.low %vm488, %vm487
  %v491 = vsel %vm489, 65537, 0
  %v492 = vsel %vm490, 65537, 0
  %v493 = vlaneseq
  %v494 = vshrl.u32 %v493, 7
  %v495 = vsub.s32 0, %v494
  %v496 = vrot.slane %v491, %v495
  %v497 = vlaneseq
  %v498 = vshrl.u32 %v497, 7
  %v499 = vsub.s32 4, %v498
  %v500 = vrot.slane %v491, %v499
  %v501 = vlaneseq
  %v502 = vshrl.u32 %v501, 7
  %v503 = vsub.s32 0, %v502
  %v504 = vrot.slane %v492, %v503
  %v505 = vlaneseq
  %v506 = vshrl.u32 %v505, 7
  %v507 = vsub.s32 4, %v506
  %v508 = vrot.slane %v492, %v507
  %vm509 = vcmp.ne.s16.totalorder %v496, 0
  %vm510 = vcmp.ne.s16.totalorder %v500, 0
  %vm511 = vcmp.ne.s16.totalorder %v504, 0
  %vm512 = vcmp.ne.s16.totalorder %v508, 0
  %v513 = vsel %vm509, %v470, 0
  %v514 = vsel %vm510, %v471, 0
  %v515 = vsel %vm511, %v472, 0
  %v516 = vsel %vm512, %v479, 0
  %517 = vrot.lane.b32.xlu0 %v167, 112
  %v518 = vpop.permute.xlu0 %517
  %519 = vrot.lane.b32.xlu0 %v168, 112
  %v520 = vpop.permute.xlu0 %519
  %521 = vrot.lane.b32.xlu0 %v177, 112
  %v522 = vpop.permute.xlu0 %521
  %523 = vrot.lane.b32.xlu0 %v178, 112
  %v524 = vpop.permute.xlu0 %523
  %vm525 = vcmask 916480
  %v526 = vsel %vm525, %v518, %v520
  %v527 = vsel %vm525, %v520, %v522
  %v528 = vsel %vm525, %v522, %v524
  %vm532 = vcmask 916480
  %v535 = vsel %vm532, %v524, %v518
  %v537 = vsel %vm128, 1, 0
  %v538 = vsel %vm129, 1, 0
  %v539 = vsel %vm130, 1, 0
  %v540 = vsel %vm131, 1, 0
  %vm541 = vcmp.eq.s32.totalorder %v537, 1
  %vm542 = vcmp.eq.s32.totalorder %v538, 1
  %vm543 = vcmp.eq.s32.totalorder %v539, 1
  %vm544 = vcmp.eq.s32.totalorder %v540, 1
  %vm545 = vmpackc.low %vm542, %vm541
  %vm546 = vmpackc.low %vm544, %vm543
  %v547 = vsel %vm545, 65537, 0
  %v548 = vsel %vm546, 65537, 0
  %v549 = vlaneseq
  %v550 = vshrl.u32 %v549, 7
  %v551 = vsub.s32 0, %v550
  %v552 = vrot.slane %v547, %v551
  %v553 = vlaneseq
  %v554 = vshrl.u32 %v553, 7
  %v555 = vsub.s32 4, %v554
  %v556 = vrot.slane %v547, %v555
  %v557 = vlaneseq
  %v558 = vshrl.u32 %v557, 7
  %v559 = vsub.s32 0, %v558
  %v560 = vrot.slane %v548, %v559
  %v561 = vlaneseq
  %v562 = vshrl.u32 %v561, 7
  %v563 = vsub.s32 4, %v562
  %v564 = vrot.slane %v548, %v563
  %vm565 = vcmp.ne.s16.totalorder %v552, 0
  %vm566 = vcmp.ne.s16.totalorder %v556, 0
  %vm567 = vcmp.ne.s16.totalorder %v560, 0
  %vm568 = vcmp.ne.s16.totalorder %v564, 0
  %v569 = vsel %vm565, %v526, 0
  %v570 = vsel %vm566, %v527, 0
  %v571 = vsel %vm567, %v528, 0
  %v572 = vsel %vm568, %v535, 0
  %573 = vrot.lane.b32.xlu0 %v167, 111
  %v574 = vpop.permute.xlu0 %573
  %575 = vrot.lane.b32.xlu0 %v168, 111
  %v576 = vpop.permute.xlu0 %575
  %577 = vrot.lane.b32.xlu0 %v177, 111
  %v578 = vpop.permute.xlu0 %577
  %579 = vrot.lane.b32.xlu0 %v178, 111
  %v580 = vpop.permute.xlu0 %579
  %vm581 = vcmask 908288
  %v582 = vsel %vm581, %v574, %v576
  %v583 = vsel %vm581, %v576, %v578
  %v584 = vsel %vm581, %v578, %v580
  %vm588 = vcmask 908288
  %v591 = vsel %vm588, %v580, %v574
  %v593 = vsel %vm152, 1, 0
  %v594 = vsel %vm153, 1, 0
  %v595 = vsel %vm154, 1, 0
  %v596 = vsel %vm155, 1, 0
  %vm597 = vcmp.eq.s32.totalorder %v593, 1
  %vm598 = vcmp.eq.s32.totalorder %v594, 1
  %vm599 = vcmp.eq.s32.totalorder %v595, 1
  %vm600 = vcmp.eq.s32.totalorder %v596, 1
  %vm601 = vmpackc.low %vm598, %vm597
  %vm602 = vmpackc.low %vm600, %vm599
  %v603 = vsel %vm601, 65537, 0
  %v604 = vsel %vm602, 65537, 0
  %v605 = vlaneseq
  %v606 = vshrl.u32 %v605, 7
  %v607 = vsub.s32 0, %v606
  %v608 = vrot.slane %v603, %v607
  %v609 = vlaneseq
  %v610 = vshrl.u32 %v609, 7
  %v611 = vsub.s32 4, %v610
  %v612 = vrot.slane %v603, %v611
  %v613 = vlaneseq
  %v614 = vshrl.u32 %v613, 7
  %v615 = vsub.s32 0, %v614
  %v616 = vrot.slane %v604, %v615
  %v617 = vlaneseq
  %v618 = vshrl.u32 %v617, 7
  %v619 = vsub.s32 4, %v618
  %v620 = vrot.slane %v604, %v619
  %vm621 = vcmp.ne.s16.totalorder %v608, 0
  %vm622 = vcmp.ne.s16.totalorder %v612, 0
  %vm623 = vcmp.ne.s16.totalorder %v616, 0
  %vm624 = vcmp.ne.s16.totalorder %v620, 0
  %v625 = vsel %vm621, %v582, 0
  %v626 = vsel %vm622, %v583, 0
  %v627 = vsel %vm623, %v584, 0
  %v628 = vsel %vm624, %v591, 0
  %v629 = vld [vmem:[%s1] sm:$0xff]
  %v630 = vld [vmem:[%s1 + $0x8] sm:$0xff]
  %v631 = vld [vmem:[%s2] sm:$0xff]
  %v632 = vld [vmem:[%s2 + $0x8] sm:$0xff]
  %634 = vset.pattern.permute.xlu0 0
  %635 = vperm.xlu0 %634, %v631
  %v636 = vpop.permute.xlu0 %635
  %639 = vset.pattern.permute.xlu0 0
  %640 = vperm.xlu0 %639, %v632
  %v641 = vpop.permute.xlu0 %640
  %v645 = vunpack.c.l.b16 %v629
  %v646 = vunpack.c.h.b16 %v629
  %v647 = vunpack.c.l.b16 %v630
  %v648 = vunpack.c.h.b16 %v630
  %v649 = vpack.c.b16 %v647, %v645
  %v650 = vpack.c.b16 %v648, %v646
  %v653 = vsel %vm252, %v650, 0
  %655 = vmatprep.subr.bf16.mxu0 %v570
  %656 = vmatpush1.bf16.msra.mxu0 %v569
  %657 = vmatprep.subr.bf16.mxu0 %v514
  %658 = vmatpush1.bf16.msra.mxu0 %v513
  %659 = vmatprep.subr.bf16.mxu0 %v458
  %660 = vmatpush1.bf16.msra.mxu0 %v457
  %661 = vmatprep.subr.bf16.mxu0 %v168
  %662 = vmatpush1.bf16.msra.mxu0 %v167
  %663 = vmatprep.subr.bf16.mxu0 %v402
  %664 = vmatpush1.bf16.msra.mxu0 %v401
  %665 = vmatprep.subr.bf16.mxu0 %v346
  %666 = vmatpush1.bf16.msra.mxu0 %v345
  %667 = vmatprep.subr.bf16.mxu0 %v290
  %668 = vmatpush1.bf16.msra.mxu0 %v289
  %669 = vmatprep.subr.bf16.mxu0 %v234
  %670 = vmatpush1.bf16.msra.mxu0 %v233
  %671 = vmatprep.subr.bf16.mxu0 0
  %672 = vmatpush2.bf16.msra.mxu0 0
  %673 = vmatprep.subr.bf16.mxu0 0
  %674 = vmatpush2.bf16.msra.mxu0 0
  %675 = vmatprep.subr.bf16.mxu0 0
  %676 = vmatpush2.bf16.msra.mxu0 0
  %677 = vmatprep.subr.bf16.mxu0 0
  %678 = vmatpush2.bf16.msra.mxu0 0
  %679 = vmatprep.subr.bf16.mxu0 0
  %680 = vmatpush2.bf16.msra.mxu0 0
  %681 = vmatprep.subr.bf16.mxu0 0
  %682 = vmatpush2.bf16.msra.mxu0 0
  %683 = vmatprep.subr.bf16.mxu0 0
  %684 = vmatpush2.bf16.msra.mxu0 0
  %685 = vmatprep.subr.bf16.mxu0 %v626
  %686 = vmatpush2.bf16.msra.mxu0 %v625
  %687 = vmatprep.mubr.bf16.mxu0 %v653
  %688 = vmatmul.mubr.bf16.gmra.mxu0 %v649
  %v689 = vpop.f32.mrf.mxu0
  %v690 = vadd.f32 %v636, %v689
  %v691 = vpop.f32.mrf.mxu0
  %v692 = vadd.f32 %v636, %v691
  %v693 = vpop.f32.mrf.mxu0
  %v694 = vadd.f32 %v641, %v693
  %v695 = vpop.f32.mrf.mxu0
  %v696 = vadd.f32 %v641, %v695
  %697 = vdwg.mxu0
  %698 = vmatprep.subr.bf16.mxu0 %v572
  %699 = vmatpush1.bf16.msra.mxu0 %v571
  %700 = vmatprep.subr.bf16.mxu0 %v516
  %701 = vmatpush1.bf16.msra.mxu0 %v515
  %702 = vmatprep.subr.bf16.mxu0 %v460
  %703 = vmatpush1.bf16.msra.mxu0 %v459
  %704 = vmatprep.subr.bf16.mxu0 %v178
  %705 = vmatpush1.bf16.msra.mxu0 %v177
  %706 = vmatprep.subr.bf16.mxu0 %v404
  %707 = vmatpush1.bf16.msra.mxu0 %v403
  %708 = vmatprep.subr.bf16.mxu0 %v348
  %709 = vmatpush1.bf16.msra.mxu0 %v347
  %710 = vmatprep.subr.bf16.mxu0 %v292
  %711 = vmatpush1.bf16.msra.mxu0 %v291
  %712 = vmatprep.subr.bf16.mxu0 %v236
  %713 = vmatpush1.bf16.msra.mxu0 %v235
  %714 = vmatprep.subr.bf16.mxu0 0
  %715 = vmatpush2.bf16.msra.mxu0 0
  %716 = vmatprep.subr.bf16.mxu0 0
  %717 = vmatpush2.bf16.msra.mxu0 0
  %718 = vmatprep.subr.bf16.mxu0 0
  %719 = vmatpush2.bf16.msra.mxu0 0
  %720 = vmatprep.subr.bf16.mxu0 0
  %721 = vmatpush2.bf16.msra.mxu0 0
  %722 = vmatprep.subr.bf16.mxu0 0
  %723 = vmatpush2.bf16.msra.mxu0 0
  %724 = vmatprep.subr.bf16.mxu0 0
  %725 = vmatpush2.bf16.msra.mxu0 0
  %726 = vmatprep.subr.bf16.mxu0 0
  %727 = vmatpush2.bf16.msra.mxu0 0
  %728 = vmatprep.subr.bf16.mxu0 %v628
  %729 = vmatpush2.bf16.msra.mxu0 %v627
  %730 = vmatprep.mubr.bf16.mxu0 %v653
  %731 = vmatmul.mubr.bf16.gmra.mxu0 %v649
  %v732 = vpop.f32.mrf.mxu0
  %v733 = vadd.f32 %v636, %v732
  %v734 = vpop.f32.mrf.mxu0
  %v735 = vadd.f32 %v636, %v734
  %v736 = vpop.f32.mrf.mxu0
  %v737 = vadd.f32 %v641, %v736
  %v738 = vpop.f32.mrf.mxu0
  %v739 = vadd.f32 %v641, %v738
  %740 = vdwg.mxu0
  %v741 = vmax.f32 %v690, 0.0
  %v742 = vmax.f32 %v692, 0.0
  %v743 = vmax.f32 %v733, 0.0
  %v744 = vmax.f32 %v735, 0.0
  %v745 = vmax.f32 %v694, 0.0
  %v746 = vmax.f32 %v696, 0.0
  %v747 = vmax.f32 %v737, 0.0
  %v748 = vmax.f32 %v739, 0.0
  %v749 = vpack.c.bf16 %v745, %v741
  %v750 = vpack.c.bf16 %v746, %v742
  %v751 = vpack.c.bf16 %v747, %v743
  %v752 = vpack.c.bf16 %v748, %v744
  %754 = vrot.lane.b32.xlu0 %v752, 17
  %v755 = vpop.permute.xlu0 %754
  %759 = vrot.lane.b32.xlu0 %v749, 17
  %v760 = vpop.permute.xlu0 %759
  %761 = vrot.lane.b32.xlu0 %v750, 17
  %v762 = vpop.permute.xlu0 %761
  %763 = vrot.lane.b32.xlu0 %v751, 17
  %v764 = vpop.permute.xlu0 %763
  %v765 = vsel %vm189, %v760, %v762
  %v766 = vsel %vm189, %v762, %v764
  %v767 = vsel %vm189, %v764, %v755
  %v773 = vsel %vm196, %v755, %v760
  %v775 = vsel %vm229, %v773, 0
  %v776 = vsel %vm230, %v765, 0
  %v777 = vsel %vm231, %v766, 0
  %v778 = vsel %vm232, %v767, 0
  %779 = vrot.lane.b32.xlu0 %v752, 16
  %v780 = vpop.permute.xlu0 %779
  %781 = vrot.lane.b32.xlu0 %v749, 16
  %v782 = vpop.permute.xlu0 %781
  %783 = vrot.lane.b32.xlu0 %v750, 16
  %v784 = vpop.permute.xlu0 %783
  %785 = vrot.lane.b32.xlu0 %v751, 16
  %v786 = vpop.permute.xlu0 %785
  %v787 = vsel %vm245, %v782, %v784
  %v788 = vsel %vm245, %v784, %v786
  %v789 = vsel %vm245, %v786, %v780
  %v795 = vsel %vm252, %v780, %v782
  %v797 = vsel %vm285, %v795, 0
  %v798 = vsel %vm286, %v787, 0
  %v799 = vsel %vm287, %v788, 0
  %v800 = vsel %vm288, %v789, 0
  %801 = vrot.lane.b32.xlu0 %v752, 15
  %v802 = vpop.permute.xlu0 %801
  %803 = vrot.lane.b32.xlu0 %v749, 15
  %v804 = vpop.permute.xlu0 %803
  %805 = vrot.lane.b32.xlu0 %v750, 15
  %v806 = vpop.permute.xlu0 %805
  %807 = vrot.lane.b32.xlu0 %v751, 15
  %v808 = vpop.permute.xlu0 %807
  %v809 = vsel %vm301, %v804, %v806
  %v810 = vsel %vm301, %v806, %v808
  %v811 = vsel %vm301, %v808, %v802
  %v817 = vsel %vm308, %v802, %v804
  %v819 = vsel %vm341, %v817, 0
  %v820 = vsel %vm342, %v809, 0
  %v821 = vsel %vm343, %v810, 0
  %v822 = vsel %vm344, %v811, 0
  %823 = vrot.lane.b32.xlu0 %v752, 1
  %v824 = vpop.permute.xlu0 %823
  %825 = vrot.lane.b32.xlu0 %v749, 1
  %v826 = vpop.permute.xlu0 %825
  %827 = vrot.lane.b32.xlu0 %v750, 1
  %v828 = vpop.permute.xlu0 %827
  %829 = vrot.lane.b32.xlu0 %v751, 1
  %v830 = vpop.permute.xlu0 %829
  %v831 = vsel %vm357, %v826, %v828
  %v832 = vsel %vm357, %v828, %v830
  %v833 = vsel %vm357, %v830, %v824
  %v839 = vsel %vm364, %v824, %v826
  %v841 = vsel %vm397, %v839, 0
  %v842 = vsel %vm398, %v831, 0
  %v843 = vsel %vm399, %v832, 0
  %v844 = vsel %vm400, %v833, 0
  %845 = vrot.lane.b32.xlu0 %v749, 127
  %v846 = vpop.permute.xlu0 %845
  %847 = vrot.lane.b32.xlu0 %v750, 127
  %v848 = vpop.permute.xlu0 %847
  %849 = vrot.lane.b32.xlu0 %v751, 127
  %v850 = vpop.permute.xlu0 %849
  %851 = vrot.lane.b32.xlu0 %v752, 127
  %v852 = vpop.permute.xlu0 %851
  %v853 = vsel %vm413, %v846, %v848
  %v854 = vsel %vm413, %v848, %v850
  %v855 = vsel %vm413, %v850, %v852
  %v861 = vsel %vm420, %v852, %v846
  %v863 = vsel %vm453, %v853, 0
  %v864 = vsel %vm454, %v854, 0
  %v865 = vsel %vm455, %v855, 0
  %v866 = vsel %vm456, %v861, 0
  %867 = vrot.lane.b32.xlu0 %v749, 113
  %v868 = vpop.permute.xlu0 %867
  %869 = vrot.lane.b32.xlu0 %v750, 113
  %v870 = vpop.permute.xlu0 %869
  %871 = vrot.lane.b32.xlu0 %v751, 113
  %v872 = vpop.permute.xlu0 %871
  %873 = vrot.lane.b32.xlu0 %v752, 113
  %v874 = vpop.permute.xlu0 %873
  %v875 = vsel %vm469, %v868, %v870
  %v876 = vsel %vm469, %v870, %v872
  %v877 = vsel %vm469, %v872, %v874
  %v883 = vsel %vm476, %v874, %v868
  %v885 = vsel %vm509, %v875, 0
  %v886 = vsel %vm510, %v876, 0
  %v887 = vsel %vm511, %v877, 0
  %v888 = vsel %vm512, %v883, 0
  %889 = vrot.lane.b32.xlu0 %v749, 112
  %v890 = vpop.permute.xlu0 %889
  %891 = vrot.lane.b32.xlu0 %v750, 112
  %v892 = vpop.permute.xlu0 %891
  %893 = vrot.lane.b32.xlu0 %v751, 112
  %v894 = vpop.permute.xlu0 %893
  %895 = vrot.lane.b32.xlu0 %v752, 112
  %v896 = vpop.permute.xlu0 %895
  %v897 = vsel %vm525, %v890, %v892
  %v898 = vsel %vm525, %v892, %v894
  %v899 = vsel %vm525, %v894, %v896
  %v905 = vsel %vm532, %v896, %v890
  %v907 = vsel %vm565, %v897, 0
  %v908 = vsel %vm566, %v898, 0
  %v909 = vsel %vm567, %v899, 0
  %v910 = vsel %vm568, %v905, 0
  %911 = vrot.lane.b32.xlu0 %v749, 111
  %v912 = vpop.permute.xlu0 %911
  %913 = vrot.lane.b32.xlu0 %v750, 111
  %v914 = vpop.permute.xlu0 %913
  %915 = vrot.lane.b32.xlu0 %v751, 111
  %v916 = vpop.permute.xlu0 %915
  %917 = vrot.lane.b32.xlu0 %v752, 111
  %v918 = vpop.permute.xlu0 %917
  %v919 = vsel %vm581, %v912, %v914
  %v920 = vsel %vm581, %v914, %v916
  %v921 = vsel %vm581, %v916, %v918
  %v927 = vsel %vm588, %v918, %v912
  %v929 = vsel %vm621, %v919, 0
  %v930 = vsel %vm622, %v920, 0
  %v931 = vsel %vm623, %v921, 0
  %v932 = vsel %vm624, %v927, 0
  %v933 = vld [vmem:[%s3] sm:$0xff]
  %v934 = vld [vmem:[%s3 + $0x8] sm:$0xff]
  %v935 = vld [vmem:[%s4] sm:$0xff]
  %v936 = vld [vmem:[%s4 + $0x8] sm:$0xff]
  %938 = vset.pattern.permute.xlu0 0
  %939 = vperm.xlu0 %938, %v935
  %v940 = vpop.permute.xlu0 %939
  %943 = vset.pattern.permute.xlu0 0
  %944 = vperm.xlu0 %943, %v936
  %v945 = vpop.permute.xlu0 %944
  %v949 = vunpack.c.l.b16 %v933
  %v950 = vunpack.c.h.b16 %v933
  %v951 = vunpack.c.l.b16 %v934
  %v952 = vunpack.c.h.b16 %v934
  %v953 = vpack.c.b16 %v951, %v949
  %v954 = vpack.c.b16 %v952, %v950
  %v957 = vsel %vm252, %v954, 0
  %959 = vmatprep.subr.bf16.mxu0 %v908
  %960 = vmatpush1.bf16.msra.mxu0 %v907
  %961 = vmatprep.subr.bf16.mxu0 %v886
  %962 = vmatpush1.bf16.msra.mxu0 %v885
  %963 = vmatprep.subr.bf16.mxu0 %v864
  %964 = vmatpush1.bf16.msra.mxu0 %v863
  %965 = vmatprep.subr.bf16.mxu0 %v750
  %966 = vmatpush1.bf16.msra.mxu0 %v749
  %967 = vmatprep.subr.bf16.mxu0 %v842
  %968 = vmatpush1.bf16.msra.mxu0 %v841
  %969 = vmatprep.subr.bf16.mxu0 %v820
  %970 = vmatpush1.bf16.msra.mxu0 %v819
  %971 = vmatprep.subr.bf16.mxu0 %v798
  %972 = vmatpush1.bf16.msra.mxu0 %v797
  %973 = vmatprep.subr.bf16.mxu0 %v776
  %974 = vmatpush1.bf16.msra.mxu0 %v775
  %975 = vmatprep.subr.bf16.mxu0 0
  %976 = vmatpush2.bf16.msra.mxu0 0
  %977 = vmatprep.subr.bf16.mxu0 0
  %978 = vmatpush2.bf16.msra.mxu0 0
  %979 = vmatprep.subr.bf16.mxu0 0
  %980 = vmatpush2.bf16.msra.mxu0 0
  %981 = vmatprep.subr.bf16.mxu0 0
  %982 = vmatpush2.bf16.msra.mxu0 0
  %983 = vmatprep.subr.bf16.mxu0 0
  %984 = vmatpush2.bf16.msra.mxu0 0
  %985 = vmatprep.subr.bf16.mxu0 0
  %986 = vmatpush2.bf16.msra.mxu0 0
  %987 = vmatprep.subr.bf16.mxu0 0
  %988 = vmatpush2.bf16.msra.mxu0 0
  %989 = vmatprep.subr.bf16.mxu0 %v930
  %990 = vmatpush2.bf16.msra.mxu0 %v929
  %991 = vmatprep.mubr.bf16.mxu0 %v957
  %992 = vmatmul.mubr.bf16.gmra.mxu0 %v953
  %v993 = vpop.f32.mrf.mxu0
  %v994 = vadd.f32 %v940, %v993
  %v995 = vpop.f32.mrf.mxu0
  %v996 = vadd.f32 %v940, %v995
  %v997 = vpop.f32.mrf.mxu0
  %v998 = vadd.f32 %v945, %v997
  %v999 = vpop.f32.mrf.mxu0
  %v1000 = vadd.f32 %v945, %v999
  %1001 = vdwg.mxu0
  %1002 = vmatprep.subr.bf16.mxu0 %v910
  %1003 = vmatpush1.bf16.msra.mxu0 %v909
  %1004 = vmatprep.subr.bf16.mxu0 %v888
  %1005 = vmatpush1.bf16.msra.mxu0 %v887
  %1006 = vmatprep.subr.bf16.mxu0 %v866
  %1007 = vmatpush1.bf16.msra.mxu0 %v865
  %1008 = vmatprep.subr.bf16.mxu0 %v752
  %1009 = vmatpush1.bf16.msra.mxu0 %v751
  %1010 = vmatprep.subr.bf16.mxu0 %v844
  %1011 = vmatpush1.bf16.msra.mxu0 %v843
  %1012 = vmatprep.subr.bf16.mxu0 %v822
  %1013 = vmatpush1.bf16.msra.mxu0 %v821
  %1014 = vmatprep.subr.bf16.mxu0 %v800
  %1015 = vmatpush1.bf16.msra.mxu0 %v799
  %1016 = vmatprep.subr.bf16.mxu0 %v778
  %1017 = vmatpush1.bf16.msra.mxu0 %v777
  %1018 = vmatprep.subr.bf16.mxu0 0
  %1019 = vmatpush2.bf16.msra.mxu0 0
  %1020 = vmatprep.subr.bf16.mxu0 0
  %1021 = vmatpush2.bf16.msra.mxu0 0
  %1022 = vmatprep.subr.bf16.mxu0 0
  %1023 = vmatpush2.bf16.msra.mxu0 0
  %1024 = vmatprep.subr.bf16.mxu0 0
  %1025 = vmatpush2.bf16.msra.mxu0 0
  %1026 = vmatprep.subr.bf16.mxu0 0
  %1027 = vmatpush2.bf16.msra.mxu0 0
  %1028 = vmatprep.subr.bf16.mxu0 0
  %1029 = vmatpush2.bf16.msra.mxu0 0
  %1030 = vmatprep.subr.bf16.mxu0 0
  %1031 = vmatpush2.bf16.msra.mxu0 0
  %1032 = vmatprep.subr.bf16.mxu0 %v932
  %1033 = vmatpush2.bf16.msra.mxu0 %v931
  %1034 = vmatprep.mubr.bf16.mxu0 %v957
  %1035 = vmatmul.mubr.bf16.gmra.mxu0 %v953
  %v1036 = vpop.f32.mrf.mxu0
  %v1037 = vadd.f32 %v940, %v1036
  %v1038 = vpop.f32.mrf.mxu0
  %v1039 = vadd.f32 %v940, %v1038
  %v1040 = vpop.f32.mrf.mxu0
  %v1041 = vadd.f32 %v945, %v1040
  %v1042 = vpop.f32.mrf.mxu0
  %v1043 = vadd.f32 %v945, %v1042
  %1044 = vdwg.mxu0
  %v1045 = vadd.f32 %v741, %v994
  %v1046 = vadd.f32 %v742, %v996
  %v1047 = vadd.f32 %v743, %v1037
  %v1048 = vadd.f32 %v744, %v1039
  %v1049 = vadd.f32 %v745, %v998
  %v1050 = vadd.f32 %v746, %v1000
  %v1051 = vadd.f32 %v747, %v1041
  %v1052 = vadd.f32 %v748, %v1043
  %v1053 = vmax.f32 %v1045, 0.0
  %v1054 = vmax.f32 %v1046, 0.0
  %v1055 = vmax.f32 %v1047, 0.0
  %v1056 = vmax.f32 %v1048, 0.0
  %v1057 = vmax.f32 %v1049, 0.0
  %v1058 = vmax.f32 %v1050, 0.0
  %v1059 = vmax.f32 %v1051, 0.0
  %v1060 = vmax.f32 %v1052, 0.0
  %1061 = vst [vmem:[%s5] sm:$0xff] %v1053
  %1062 = vst [vmem:[%s5 + $0x8] sm:$0xff] %v1054
  %1063 = vst [vmem:[%s5 + $0x10] sm:$0xff] %v1057
  %1064 = vst [vmem:[%s5 + $0x18] sm:$0xff] %v1058
  %s1065 = scalar_lea.vmem %s5, 32
  %1066 = vst [vmem:[%s1065] sm:$0xff] %v1055
  %1067 = vst [vmem:[%s1065 + $0x8] sm:$0xff] %v1056
  %1068 = vst [vmem:[%s1065 + $0x10] sm:$0xff] %v1059
  %1069 = vst [vmem:[%s1065 + $0x18] sm:$0xff] %v1060
  // Predicated region
  $region22: #{simple_res_block.1} parent=0 // pred_check
    _
  $region23: #{simple_res_block.1} parent=0 // pred_check_branch
    %1071 = sbr.rel (0) target = $region25
  $region24: #{simple_res_block.1} parent=0 // pred_region
    _
  $region25: #{simple_res_block.1} parent=0 // pred_fallthru
    _
  // Predicated region
  $region26: #{simple_res_block.1} parent=0 // pred_check
    _
  $region27: #{simple_res_block.1} parent=0 // pred_check_branch
    %1073 = sbr.rel (0) target = $region29
  $region28: #{simple_res_block.1} parent=0 // pred_region
    _
  $region29: #{simple_res_block.1} parent=0 // pred_fallthru
    _

</llo_original>
